<compile_context>
chip_gen: v7x
topology: tpu7x:2x2x1
jax: 0.10.0
libtpu: 0.0.40
codegen_flags: <defaults>
</compile_context>

<pallas_src>
import functools

import jax
import jax.numpy as jnp
from jax.experimental import pallas as pl
from jax.experimental.pallas import tpu as pltpu


def _adain_kernel(c_ref, s_ref, o_ref, *, hw_c, hw_s, eps):
    # c_ref / o_ref: (BR, hw_c) tiles; s_ref: (BR, hw_s) tile.  One row = one
    # (n, c) instance plane.
    # TODO(synk): for bf16 inputs keep the per-element path in bf16 on
    # v6e/v7x (f32 only for the row reductions); current path upcasts the
    # whole tile to f32 for robustness.
    c = c_ref[...].astype(jnp.float32)
    s = s_ref[...].astype(jnp.float32)

    c_mean = jnp.sum(c, axis=-1, keepdims=True) * (1.0 / hw_c)
    s_mean = jnp.sum(s, axis=-1, keepdims=True) * (1.0 / hw_s)

    # Centered tiles reused for both variance and the output (more stable than
    # the E[x^2] - E[x]^2 form).
    c_cent = c - c_mean
    s_cent = s - s_mean

    # torch.std is unbiased by default: divide by (N - 1), per-tensor N.
    c_var = jnp.sum(c_cent * c_cent, axis=-1, keepdims=True) * (1.0 / max(hw_c - 1, 1))
    s_var = jnp.sum(s_cent * s_cent, axis=-1, keepdims=True) * (1.0 / max(hw_s - 1, 1))

    c_std = jnp.sqrt(c_var) + eps
    s_std = jnp.sqrt(s_var) + eps

    # One divide per ROW (BR divides), not per element (BR*hw divides).
    rscale = s_std / c_std
    o_ref[...] = (c_cent * rscale + s_mean).astype(o_ref.dtype)


def adain(content, style, epsilon=1e-5):
    assert content.shape[:2] == style.shape[:2], (
        "Content and Style should have the same batch and channel size")
    n, ch, h, w = content.shape
    sh, sw = style.shape[2], style.shape[3]

    rows = n * ch
    hw_c = h * w
    hw_s = sh * sw

    content2d = content.reshape(rows, hw_c)
    style2d = style.reshape(rows, hw_s)

    itemsize = jnp.dtype(content.dtype).itemsize
    # VMEM per tile-row:
    #   pipeline buffers: 2x double-buffered (content + style + output) blocks
    #   in-kernel temps:  f32 copies of (c, c_cent, s, s_cent) ~ upper bound
    pipeline_bytes_per_row = 2 * (2 * hw_c + hw_s) * itemsize
    temp_bytes_per_row = (2 * hw_c + 2 * hw_s) * 4
    bytes_per_row = pipeline_bytes_per_row + temp_bytes_per_row
    # Keep the total working set <= ~24 MiB so it fits every generation's
    # scoped VMEM (incl. v7x) with headroom, while per-block DMAs stay large
    # enough (multi-MiB) that the ~0.35us per-step overhead amortizes away.
    budget = 24 * 1024 * 1024
    br = budget // max(bytes_per_row, 1)
    br = max(8, min(1024, (br // 8) * 8))
    # Never tile wider than the (8-aligned) row count.
    rows8 = ((rows + 7) // 8) * 8
    br = min(br, rows8)

    num_tiles = pl.cdiv(rows, br)
    rows_pad = num_tiles * br
    if rows_pad != rows:
        # Zero-pad extra rows: their std becomes eps (no NaN); sliced off below.
        content2d = jnp.pad(content2d, ((0, rows_pad - rows), (0, 0)))
        style2d = jnp.pad(style2d, ((0, rows_pad - rows), (0, 0)))

    kernel = functools.partial(
        _adain_kernel, hw_c=hw_c, hw_s=hw_s, eps=float(epsilon))

    # TODO(synk): if hw_c is not a multiple of 128, pad the lane axis (with
    # masked reductions) in the wrapper to get unmasked lane-dense stores.
    out2d = pl.pallas_call(
        kernel,
        out_shape=jax.ShapeDtypeStruct((rows_pad, hw_c), content.dtype),
        grid_spec=pltpu.PrefetchScalarGridSpec(
            num_scalar_prefetch=0,
            grid=(num_tiles,),
            in_specs=[
                pl.BlockSpec((br, hw_c), lambda i: (i, 0)),
                pl.BlockSpec((br, hw_s), lambda i: (i, 0)),
            ],
            out_specs=pl.BlockSpec((br, hw_c), lambda i: (i, 0)),
        ),
        compiler_params=pltpu.CompilerParams(
            dimension_semantics=("parallel",),
            vmem_limit_bytes=48 * 1024 * 1024),
    )(content2d, style2d)

    if rows_pad != rows:
        out2d = out2d[:rows]
    return out2d.reshape(n, ch, h, w)


def _adain_ref(content, style, epsilon=1e-5):
    """Pure-JAX reference matching the PyTorch module."""
    c_mean = content.mean(axis=(2, 3), keepdims=True)
    s_mean = style.mean(axis=(2, 3), keepdims=True)
    c_std = content.std(axis=(2, 3), keepdims=True, ddof=1) + epsilon
    s_std = style.std(axis=(2, 3), keepdims=True, ddof=1) + epsilon
    return (content - c_mean) / c_std * s_std + s_mean


if __name__ == "__main__":
    key = jax.random.PRNGKey(0)
    k1, k2, k3, k4 = jax.random.split(key, 4)

    # Case 1: equal content/style spatial sizes.
    content = jax.random.normal(k1, (2, 4, 16, 16), dtype=jnp.float32)
    style = jax.random.normal(k2, (2, 4, 16, 16), dtype=jnp.float32) * 2.0 + 0.5
    out = jax.block_until_ready(adain(content, style))
    ref = _adain_ref(content, style)
    assert out.shape == (2, 4, 16, 16)
    assert jnp.allclose(out, ref, atol=1e-4, rtol=1e-4), (
        float(jnp.max(jnp.abs(out - ref))))

    # Case 2: different style spatial size (exercises the per-tensor hw fix)
    # and a ragged row count 3*5=15 (exercises row padding).
    content2 = jax.random.normal(k3, (3, 5, 16, 16), dtype=jnp.float32)
    style2 = jax.random.normal(k4, (3, 5, 8, 8), dtype=jnp.float32) * 1.5 - 0.25
    out2 = jax.block_until_ready(adain(content2, style2))
    ref2 = _adain_ref(content2, style2)
    assert out2.shape == (3, 5, 16, 16)
    assert jnp.allclose(out2, ref2, atol=1e-4, rtol=1e-4), (
        float(jnp.max(jnp.abs(out2 - ref2))))

    print("KERNEL_OK")
</pallas_src>

<mosaic_0001>
module attributes {stable_mosaic.version = 11 : i64} {
  func.func @_adain_kernel(%arg0: i32, %arg1: memref<8x256xf32, #tpu.memory_space<vmem>>, %arg2: memref<8x256xf32, #tpu.memory_space<vmem>>, %arg3: memref<8x256xf32, #tpu.memory_space<vmem>>) attributes {dimension_semantics = [#tpu.dimension_semantics<parallel>], iteration_bounds = array<i64: 1>, scalar_prefetch = 0 : i64, scratch_operands = 0 : i64, tpu.core_type = #tpu.core_type<tc>, window_params = [{transform_indices = @transform_0, window_bounds = array<i64: 8, 256>}, {transform_indices = @transform_1, window_bounds = array<i64: 8, 256>}, {transform_indices = @transform_2, window_bounds = array<i64: 8, 256>}]} {
    %c0 = arith.constant 0 : index
    %c0_0 = arith.constant 0 : index
    %0 = vector.load %arg1[%c0, %c0_0] : memref<8x256xf32, #tpu.memory_space<vmem>>, vector<8x256xf32>
    %c0_1 = arith.constant 0 : index
    %c0_2 = arith.constant 0 : index
    %1 = vector.load %arg2[%c0_1, %c0_2] : memref<8x256xf32, #tpu.memory_space<vmem>>, vector<8x256xf32>
    %cst = arith.constant dense<0.000000e+00> : vector<8xf32>
    %2 = vector.multi_reduction <add>, %0, %cst [1] : vector<8x256xf32> to vector<8xf32>
    %3 = vector.shape_cast %2 : vector<8xf32> to vector<8x1xf32>
    %cst_3 = arith.constant 3.906250e-03 : f32
    %4 = vector.broadcast %cst_3 : f32 to vector<8x1xf32>
    %5 = arith.mulf %3, %4 : vector<8x1xf32>
    %cst_4 = arith.constant dense<0.000000e+00> : vector<8xf32>
    %6 = vector.multi_reduction <add>, %1, %cst_4 [1] : vector<8x256xf32> to vector<8xf32>
    %7 = vector.shape_cast %6 : vector<8xf32> to vector<8x1xf32>
    %cst_5 = arith.constant 3.906250e-03 : f32
    %8 = vector.broadcast %cst_5 : f32 to vector<8x1xf32>
    %9 = arith.mulf %7, %8 : vector<8x1xf32>
    %10 = vector.broadcast %5 : vector<8x1xf32> to vector<8x256xf32>
    %11 = arith.subf %0, %10 : vector<8x256xf32>
    %12 = vector.broadcast %9 : vector<8x1xf32> to vector<8x256xf32>
    %13 = arith.subf %1, %12 : vector<8x256xf32>
    %14 = arith.mulf %11, %11 : vector<8x256xf32>
    %cst_6 = arith.constant dense<0.000000e+00> : vector<8xf32>
    %15 = vector.multi_reduction <add>, %14, %cst_6 [1] : vector<8x256xf32> to vector<8xf32>
    %16 = vector.shape_cast %15 : vector<8xf32> to vector<8x1xf32>
    %cst_7 = arith.constant 0.00392156886 : f32
    %17 = vector.broadcast %cst_7 : f32 to vector<8x1xf32>
    %18 = arith.mulf %16, %17 : vector<8x1xf32>
    %19 = arith.mulf %13, %13 : vector<8x256xf32>
    %cst_8 = arith.constant dense<0.000000e+00> : vector<8xf32>
    %20 = vector.multi_reduction <add>, %19, %cst_8 [1] : vector<8x256xf32> to vector<8xf32>
    %21 = vector.shape_cast %20 : vector<8xf32> to vector<8x1xf32>
    %cst_9 = arith.constant 0.00392156886 : f32
    %22 = vector.broadcast %cst_9 : f32 to vector<8x1xf32>
    %23 = arith.mulf %21, %22 : vector<8x1xf32>
    %24 = math.sqrt %18 : vector<8x1xf32>
    %cst_10 = arith.constant 9.99999974E-6 : f32
    %25 = vector.broadcast %cst_10 : f32 to vector<8x1xf32>
    %26 = arith.addf %24, %25 : vector<8x1xf32>
    %27 = math.sqrt %23 : vector<8x1xf32>
    %cst_11 = arith.constant 9.99999974E-6 : f32
    %28 = vector.broadcast %cst_11 : f32 to vector<8x1xf32>
    %29 = arith.addf %27, %28 : vector<8x1xf32>
    %30 = arith.divf %29, %26 : vector<8x1xf32>
    %31 = vector.broadcast %30 : vector<8x1xf32> to vector<8x256xf32>
    %32 = arith.mulf %11, %31 : vector<8x256xf32>
    %33 = vector.broadcast %9 : vector<8x1xf32> to vector<8x256xf32>
    %34 = arith.addf %32, %33 : vector<8x256xf32>
    %c0_12 = arith.constant 0 : index
    %c0_13 = arith.constant 0 : index
    %35 = vector.load %arg3[%c0_12, %c0_13] : memref<8x256xf32, #tpu.memory_space<vmem>>, vector<8x256xf32>
    tpu.vector_store %arg3[%c0_12, %c0_13], %34 {strides = array<i32>} : memref<8x256xf32, #tpu.memory_space<vmem>>, vector<8x256xf32>,
    return
  }
  func.func @transform_0(%arg0: i32) -> (i32, i32) {
    %c0_i32 = arith.constant 0 : i32
    %c0_i32_0 = arith.constant 0 : i32
    return %arg0, %c0_i32 : i32, i32
  }
  func.func @transform_1(%arg0: i32) -> (i32, i32) {
    %c0_i32 = arith.constant 0 : i32
    %c0_i32_0 = arith.constant 0 : i32
    return %arg0, %c0_i32 : i32, i32
  }
  func.func @transform_2(%arg0: i32) -> (i32, i32) {
    %c0_i32 = arith.constant 0 : i32
    %c0_i32_0 = arith.constant 0 : i32
    return %arg0, %c0_i32 : i32, i32
  }
}

</mosaic_0001>

<llo_original>
// kernel: tpu_custom_call.1
$region0: #{tpu_custom_call.1}
  #allocation0 [shape = 'u32[]', space=smem, size = 0x4, offset = 0x4, fixed_abs, tag = 'smem constant byte address 0x4 - core index']
  #allocation1 [shape = 'u32[144,128]{1,0:T(1,128)}', space=vmem, size = 0x12000, scoped, tag = 'internal scratch']
  %s0 = inlined_call_operand.hbm [shape: f32[8,256], index: 0, kind: input, shape index: {}]
  %s1 = inlined_call_operand.hbm [shape: f32[8,256], index: 1, kind: input, shape index: {}]
  %s2 = inlined_call_operand.hbm [shape: f32[8,256], index: 2, kind: output, shape index: {}]
  %s3 = sld [smem:[#allocation0]]
  $region26: #{tpu_custom_call.1} parent=0
    _
  %s5 = ssub.s32 1, %s3
  %s6 = scalar_select 0, %s5, %s3
  $region1: #{tpu_custom_call.1} parent=0
    #allocation2 [shape = 'u8[8192]{0}', space=vmem, size = 0x2000, scoped, tag = 'input window, operand 0, single buffered']
    #allocation3 [shape = 's32[1]{0}', space=sflag, size = 0x4, scoped, tag = 'scoped memory for tpu_custom_call.1']
    #allocation4 [shape = 's32[1]{0}', space=sflag, size = 0x4, scoped, tag = 'scoped memory for tpu_custom_call.1']
    #allocation5 [shape = 'u8[8192]{0}', space=vmem, size = 0x2000, scoped, tag = 'input window, operand 1, single buffered']
    #allocation6 [shape = 's32[1]{0}', space=sflag, size = 0x4, scoped, tag = 'scoped memory for tpu_custom_call.1']
    #allocation7 [shape = 'u8[8192]{0}', space=vmem, size = 0x2000, scoped, tag = 'output window, operand 0, single buffered']
    %7 = vsyncpa [#allocation3], 0
    %8 = vsyncpa [#allocation6], 0
    %9 = vsyncpa [#allocation4], 0
    // Predicated region
    $region2: #{tpu_custom_call.1} parent=1 // pred_check
      _
    $region3: #{tpu_custom_call.1} parent=1 // pred_check_branch
      %11 = sbr.rel (0) target = $region5
    $region4: #{tpu_custom_call.1} parent=1 // pred_region
      %s13 = ssub.s32 256, 256
      %14 = vsyncadd [#allocation3], %s13
      %s16 = sshll.u32 [#allocation2], 4
      %s17 = int_to_ptr.vmem [resolvable:$true] %s16
      %19 = dma.hbm_to_vmem [thread:$0]  %s0, 256, %s17, [#allocation3]
    $region5: #{tpu_custom_call.1} parent=1 // pred_fallthru
      _
    // Predicated region
    $region6: #{tpu_custom_call.1} parent=1 // pred_check
      _
    $region7: #{tpu_custom_call.1} parent=1 // pred_check_branch
      %21 = sbr.rel (0) target = $region9
    $region8: #{tpu_custom_call.1} parent=1 // pred_region
      %s23 = ssub.s32 256, 256
      %24 = vsyncadd [#allocation6], %s23
      %s26 = sshll.u32 [#allocation5], 4
      %s27 = int_to_ptr.vmem [resolvable:$true] %s26
      %29 = dma.hbm_to_vmem [thread:$0]  %s1, 256, %s27, [#allocation6]
    $region9: #{tpu_custom_call.1} parent=1 // pred_fallthru
      _
    // Predicated region
    $region10: #{tpu_custom_call.1} parent=1 // pred_check
      _
    $region11: #{tpu_custom_call.1} parent=1 // pred_check_branch
      %31 = sbr.rel (0) target = $region13
    $region12: #{tpu_custom_call.1} parent=1 // pred_region
      %32 = dma.done [#allocation3], 256
    $region13: #{tpu_custom_call.1} parent=1 // pred_fallthru
      _
    // Predicated region
    $region14: #{tpu_custom_call.1} parent=1 // pred_check
      _
    $region15: #{tpu_custom_call.1} parent=1 // pred_check_branch
      %34 = sbr.rel (0) target = $region17
    $region16: #{tpu_custom_call.1} parent=1 // pred_region
      %35 = dma.done [#allocation6], 256
    $region17: #{tpu_custom_call.1} parent=1 // pred_fallthru
      _
    %v36 = vld [vmem:[#allocation2] sm:$0xff]
    %v37 = vld [vmem:[#allocation2 + $0x8] sm:$0xff]
    %v38 = vld [vmem:[#allocation5] sm:$0xff]
    %v39 = vld [vmem:[#allocation5 + $0x8] sm:$0xff]
    %v40 = vadd.f32 %v36, %v37
    %41 = vadd.xlane.f32.xlu0 %v40
    %v42 = vpop.xlane.xlu0 %41
    %v43 = vmul.f32 %v42, 0.00390625
    %v44 = vadd.f32 %v38, %v39
    %45 = vadd.xlane.f32.xlu0 %v44
    %v46 = vpop.xlane.xlu0 %45
    %v47 = vmul.f32 %v46, 0.00390625
    %v48 = vsub.f32 %v36, %v43
    %v49 = vsub.f32 %v37, %v43
    %v50 = vsub.f32 %v38, %v47
    %v51 = vsub.f32 %v39, %v47
    %v52 = vmul.f32 %v48, %v48
    %v53 = vmul.f32 %v49, %v49
    %v54 = vadd.f32 %v52, %v53
    %55 = vadd.xlane.f32.xlu0 %v54
    %v56 = vpop.xlane.xlu0 %55
    %v57 = vmul.f32 %v56, 0.003921569
    %v58 = vmul.f32 %v50, %v50
    %v59 = vmul.f32 %v51, %v51
    %v60 = vadd.f32 %v58, %v59
    %61 = vadd.xlane.f32.xlu0 %v60
    %v62 = vpop.xlane.xlu0 %61
    %v63 = vmul.f32 %v62, 0.003921569
    %v64 = vrsqrt.pop %v57
    %v65 = vmul.f32 %v57, %v64
    %vm66 = vcmp.eq.f32.partialorder %v57, inf
    %v67 = vsel %vm66, %v57, %v65
    %vm68 = vcmp.eq.f32.partialorder %v57, 0.0
    %v69 = vand.u32 %v57, 2147483648
    %v70 = vsel %vm68, %v69, %v67
    %v71 = vadd.f32 %v70, 1e-05
    %v72 = vrsqrt.pop %v63
    %v73 = vmul.f32 %v63, %v72
    %vm74 = vcmp.eq.f32.partialorder %v63, inf
    %v75 = vsel %vm74, %v63, %v73
    %vm76 = vcmp.eq.f32.partialorder %v63, 0.0
    %v77 = vand.u32 %v63, 2147483648
    %v78 = vsel %vm76, %v77, %v75
    %v79 = vadd.f32 %v78, 1e-05
    %v80 = vrcp.pop %v71
    %v81 = vmul.f32 %v79, %v80
    %v82 = vmul.f32 %v48, %v81
    %v83 = vmul.f32 %v49, %v81
    %v84 = vadd.f32 %v82, %v47
    %v85 = vadd.f32 %v83, %v47
    %86 = vst [vmem:[#allocation7] sm:$0xff] %v84
    %87 = vst [vmem:[#allocation7 + $0x8] sm:$0xff] %v85
    // Predicated region
    $region18: #{tpu_custom_call.1} parent=1 // pred_check
      _
    $region19: #{tpu_custom_call.1} parent=1 // pred_check_branch
      %89 = sbr.rel (0) target = $region21
    $region20: #{tpu_custom_call.1} parent=1 // pred_region
      %s91 = ssub.s32 256, 256
      %92 = vsyncadd [#allocation4], %s91
      %s94 = sshll.u32 [#allocation7], 4
      %s95 = int_to_ptr.vmem [resolvable:$true] %s94
      %97 = dma.vmem_to_hbm [thread:$0]  %s95, 256, %s2, [#allocation4]
    $region21: #{tpu_custom_call.1} parent=1 // pred_fallthru
      _
    // Predicated region
    $region22: #{tpu_custom_call.1} parent=1 // pred_check
      _
    $region23: #{tpu_custom_call.1} parent=1 // pred_check_branch
      %99 = sbr.rel (0) target = $region25
    $region24: #{tpu_custom_call.1} parent=1 // pred_region
      %100 = dma.done [#allocation4], 256
    $region25: #{tpu_custom_call.1} parent=1 // pred_fallthru
      _
    %101 = vsyncpa [#allocation3], 1
    %102 = vsyncpa [#allocation6], 1
    %103 = vsyncpa [#allocation4], 1

</llo_original>
